<compile_context>
chip_gen: v5e
topology: v5e:2x2
jax: 0.10.0
libtpu: 0.0.40
codegen_flags: <defaults>
</compile_context>

<pallas_src>
import math
import functools

import jax
import jax.numpy as jnp
from jax.experimental import pallas as pl
from jax.experimental.pallas import tpu as pltpu

LANE = 128


def _round_up(x, m):
    return (x + m - 1) // m * m


def _vmem_bytes(shape, itemsize):
    """Rough VMEM footprint of one buffer including (sublane, lane) tile padding."""
    if len(shape) == 0:
        return itemsize
    if len(shape) == 1:
        return _round_up(int(shape[0]), LANE) * itemsize
    sub = 8 * max(1, 4 // itemsize)          # 8 rows for f32, 16 for bf16
    lead = 1
    for d in shape[:-2]:
        lead *= int(d)
    return (lead * _round_up(int(shape[-2]), sub)
            * _round_up(int(shape[-1]), LANE) * itemsize)


def _matmul_bias_kernel(lhs_ref, w_ref, b_ref, o_ref, *, if_bias):
    # lhs_ref : (tile_m, K)       bf16   im2col rows (K = kh*kw*cin, lane dim)
    # w_ref   : (K, tile_n)       bf16   fused conv weights, lane-dense cout tile
    # b_ref   : (1, tile_n)       f32
    # o_ref   : (tile_m, tile_n)  bf16
    acc = jnp.dot(lhs_ref[...], w_ref[...],
                  preferred_element_type=jnp.float32)      # single fused MXU matmul
    if if_bias:
        acc = acc + b_ref[...]
    o_ref[...] = acc.astype(o_ref.dtype)


def conv2d_pallas(x, w, b=None, stride=(1, 1), padding=(1, 1), if_bias=True,
                  tile_m=None):
    """x: (N, Cin, H, W)  w: (Cout, Cin, kh, kw)  b: (Cout,) -> (N, Cout, Ho, Wo) f32."""
    N, C, H, W = x.shape
    cout, cin, kh, kw = w.shape
    assert cin == C
    sh, sw = stride
    ph, pw = padding
    Ho = (H + 2 * ph - kh) // sh + 1
    Wo = (W + 2 * pw - kw) // sw + 1
    assert Ho >= 1 and Wo >= 1

    K = kh * kw * C                           # fused im2col contraction size
    cout_p = _round_up(cout, LANE)            # lane-dense output channels
    tile_n = 256 if (cout_p % 256 == 0) else 128
    M = N * Ho * Wo                           # one matmul row per output pixel

    if tile_m is None:
        # >=256 rows to fill the 256-wide MXU (v6e/v7x); >= ~0.5 MiB of useful
        # output per step; keep >=2 grid steps when there is enough work (v7x
        # megacore); cap by a VMEM budget (double-buffered lhs/out + f32 acc).
        want = max(256, (512 * 1024) // (cout_p * 2))
        vmem_cap = max(256, (12 << 20) // (4 * K + 8 * cout_p))
        half = max(256, _round_up(M, 512) // 2)
        tile_m = min(want, half, vmem_cap, 4096)
        tile_m = max(256, (tile_m // 256) * 256)
    else:
        tile_m = max(8, _round_up(int(tile_m), 8))
    M_pad = _round_up(M, tile_m)

    # --- one fused XLA prep pass: NCHW->NHWC, bf16, zero pad, im2col patch build.
    x_nhwc = jnp.transpose(x, (0, 2, 3, 1)).astype(jnp.bfloat16)       # (N,H,W,C)
    x_pad = jnp.pad(x_nhwc, ((0, 0), (ph, ph), (pw, pw), (0, 0)))
    cols = []
    for i in range(kh):                                                # static taps
        for j in range(kw):
            cols.append(x_pad[:, i:i + sh * (Ho - 1) + 1:sh,
                              j:j + sw * (Wo - 1) + 1:sw, :])          # (N,Ho,Wo,C)
    patches = jnp.concatenate(cols, axis=-1) if len(cols) > 1 else cols[0]
    lhs = patches.reshape(M, K)                                        # (M, K) bf16
    lhs = jnp.pad(lhs, ((0, M_pad - M), (0, 0)))

    # weights (cout,cin,kh,kw) -> (kh*kw*cin, cout_p) bf16, matching LHS K order.
    w_mat = jnp.transpose(w, (2, 3, 1, 0)).reshape(K, cout)
    w_p = jnp.pad(w_mat.astype(jnp.bfloat16), ((0, 0), (0, cout_p - cout)))
    if b is None:
        b = jnp.zeros((cout,), jnp.float32)
    b_p = jnp.pad(b.astype(jnp.float32), (0, cout_p - cout)).reshape(1, cout_p)

    grid = (M_pad // tile_m, cout_p // tile_n)

    # Explicit scoped-VMEM limit from the actual block sizes (v5e default 16 MiB /
    # v7x default 32 MiB are too small once channels grow); capped at v7x physical.
    est = (2 * (_vmem_bytes((tile_m, K), 2)
                + _vmem_bytes((K, tile_n), 2)
                + _vmem_bytes((1, tile_n), 4)
                + _vmem_bytes((tile_m, tile_n), 2))
           + _vmem_bytes((tile_m, tile_n), 4))
    vmem_limit = int(min(64 << 20, max(32 << 20, 2 * est)))

    kern = functools.partial(_matmul_bias_kernel, if_bias=if_bias)

    out_flat = pl.pallas_call(
        kern,
        out_shape=jax.ShapeDtypeStruct((M_pad, cout_p), jnp.bfloat16),
        grid=grid,
        in_specs=[
            pl.BlockSpec((tile_m, K), lambda i, j: (i, 0)),
            pl.BlockSpec((K, tile_n), lambda i, j: (0, j)),
            pl.BlockSpec((1, tile_n), lambda i, j: (0, j)),
        ],
        out_specs=pl.BlockSpec((tile_m, tile_n), lambda i, j: (i, j)),
        compiler_params=pltpu.CompilerParams(
            dimension_semantics=("parallel", "parallel"),
            vmem_limit_bytes=vmem_limit),
    )(lhs, w_p, b_p)

    # Crop in bf16 first (16x less data for tiny cout), then transpose to NCHW.
    out = out_flat[:M, :cout].reshape(N, Ho, Wo, cout)
    return jnp.transpose(out, (0, 3, 1, 2)).astype(jnp.float32)


class ConvPallas:
    """Mirrors snnlib Conv.__init__ parameter shapes / init; forward = conv2d."""

    def __init__(self, cin, cout, kernel_size=(3, 3), stride=(1, 1),
                 padding=(1, 1), if_bias_conv=True, key=None):
        self.cin, self.cout = cin, cout
        self.stride, self.padding = stride, padding
        self.if_bias_conv = if_bias_conv
        key = jax.random.PRNGKey(42) if key is None else key
        # nn.init.normal_(zeros(cout,cin,kh,kw), 0, 0.75/sqrt(cin))
        self.weight_conv = (0.75 / math.sqrt(cin)) * jax.random.normal(
            key, (cout, cin, kernel_size[0], kernel_size[1]), dtype=jnp.float32)
        self.bias_conv = jnp.zeros((cout,), jnp.float32)

    def __call__(self, x):
        return conv2d_pallas(x, self.weight_conv, self.bias_conv,
                             self.stride, self.padding, self.if_bias_conv)


if __name__ == "__main__":
    key = jax.random.PRNGKey(0)
    kx, kw_key = jax.random.split(key)

    N, Cin, H, W = 2, 4, 16, 16
    Cout = 8

    x = jax.random.normal(kx, (N, Cin, H, W), dtype=jnp.float32)
    mod = ConvPallas(Cin, Cout, kernel_size=(3, 3), stride=(1, 1),
                     padding=(1, 1), if_bias_conv=True, key=kw_key)

    out = jax.block_until_ready(mod(x))
    assert out.shape == (N, Cout, H, W), out.shape

    # Reference: same bf16-rounded inputs, f32 accumulation, via XLA conv.
    x_bf = x.astype(jnp.bfloat16).astype(jnp.float32)
    w_bf = mod.weight_conv.astype(jnp.bfloat16).astype(jnp.float32)
    ref = jax.lax.conv_general_dilated(
        x_bf, w_bf, window_strides=(1, 1), padding=((1, 1), (1, 1)),
        dimension_numbers=("NCHW", "OIHW", "NCHW"),
        precision=jax.lax.Precision.HIGHEST)
    ref = ref + mod.bias_conv[None, :, None, None]
    err = float(jnp.max(jnp.abs(out - ref)))
    assert jnp.allclose(out, ref, atol=2e-2, rtol=2e-2), err

    # Stride-2 / no-padding sanity check (exercises the fixed stride>1 path).
    out2 = jax.block_until_ready(
        conv2d_pallas(x, mod.weight_conv, mod.bias_conv,
                      stride=(2, 2), padding=(0, 0), if_bias=True))
    ref2 = jax.lax.conv_general_dilated(
        x_bf, w_bf, window_strides=(2, 2), padding=((0, 0), (0, 0)),
        dimension_numbers=("NCHW", "OIHW", "NCHW"),
        precision=jax.lax.Precision.HIGHEST)
    ref2 = ref2 + mod.bias_conv[None, :, None, None]
    assert out2.shape == ref2.shape, (out2.shape, ref2.shape)
    assert jnp.allclose(out2, ref2, atol=2e-2, rtol=2e-2), (
        float(jnp.max(jnp.abs(out2 - ref2))))

    print("KERNEL_OK")
</pallas_src>

<mosaic_0001>
module attributes {stable_mosaic.version = 11 : i64} {
  func.func @_matmul_bias_kernel(%arg0: i32, %arg1: i32, %arg2: memref<256x36xbf16, #tpu.memory_space<vmem>>, %arg3: memref<36x128xbf16, #tpu.memory_space<vmem>>, %arg4: memref<1x128xf32, #tpu.memory_space<vmem>>, %arg5: memref<256x128xbf16, #tpu.memory_space<vmem>>) attributes {dimension_semantics = [#tpu.dimension_semantics<parallel>, #tpu.dimension_semantics<parallel>], iteration_bounds = array<i64: 2, 1>, scalar_prefetch = 0 : i64, scratch_operands = 0 : i64, tpu.core_type = #tpu.core_type<tc>, window_params = [{transform_indices = @transform_0, window_bounds = array<i64: 256, 36>}, {transform_indices = @transform_1, window_bounds = array<i64: 36, 128>}, {transform_indices = @transform_2, window_bounds = array<i64: 1, 128>}, {transform_indices = @transform_3, window_bounds = array<i64: 256, 128>}]} {
    %c0 = arith.constant 0 : index
    %c0_0 = arith.constant 0 : index
    %0 = vector.load %arg2[%c0, %c0_0] : memref<256x36xbf16, #tpu.memory_space<vmem>>, vector<256x36xbf16>
    %c0_1 = arith.constant 0 : index
    %c0_2 = arith.constant 0 : index
    %1 = vector.load %arg3[%c0_1, %c0_2] : memref<36x128xbf16, #tpu.memory_space<vmem>>, vector<36x128xbf16>
    %cst = arith.constant dense<0.000000e+00> : vector<256x128xf32>
    %2 = tpu.matmul %0, %1, %cst {dimension_numbers = #tpu.dot_dimension_numbers<[1], [0], [0], [1], [0, 0, 1, 1], [], []>} : vector<256x36xbf16>, vector<36x128xbf16>, vector<256x128xf32> -> vector<256x128xf32>
    %c0_3 = arith.constant 0 : index
    %c0_4 = arith.constant 0 : index
    %3 = vector.load %arg4[%c0_3, %c0_4] : memref<1x128xf32, #tpu.memory_space<vmem>>, vector<1x128xf32>
    %4 = vector.broadcast %3 : vector<1x128xf32> to vector<256x128xf32>
    %5 = arith.addf %2, %4 : vector<256x128xf32>
    %6 = arith.truncf %5 : vector<256x128xf32> to vector<256x128xbf16>
    %c0_5 = arith.constant 0 : index
    %c0_6 = arith.constant 0 : index
    %7 = vector.load %arg5[%c0_5, %c0_6] : memref<256x128xbf16, #tpu.memory_space<vmem>>, vector<256x128xbf16>
    tpu.vector_store %arg5[%c0_5, %c0_6], %6 {strides = array<i32>} : memref<256x128xbf16, #tpu.memory_space<vmem>>, vector<256x128xbf16>,
    return
  }
  func.func @transform_0(%arg0: i32, %arg1: i32) -> (i32, i32) {
    %c0_i32 = arith.constant 0 : i32
    %c0_i32_0 = arith.constant 0 : i32
    return %arg0, %c0_i32 : i32, i32
  }
  func.func @transform_1(%arg0: i32, %arg1: i32) -> (i32, i32) {
    %c0_i32 = arith.constant 0 : i32
    %c0_i32_0 = arith.constant 0 : i32
    return %c0_i32, %arg1 : i32, i32
  }
  func.func @transform_2(%arg0: i32, %arg1: i32) -> (i32, i32) {
    %c0_i32 = arith.constant 0 : i32
    %c0_i32_0 = arith.constant 0 : i32
    return %c0_i32, %arg1 : i32, i32
  }
  func.func @transform_3(%arg0: i32, %arg1: i32) -> (i32, i32) {
    %c0_i32 = arith.constant 0 : i32
    return %arg0, %arg1 : i32, i32
  }
}

</mosaic_0001>

<llo_original>
// kernel: tpu_custom_call.1
$region0: #{tpu_custom_call.1}
  #allocation0 [shape = 'u32[]', space=smem, size = 0x4, offset = 0x4, fixed_abs, tag = 'smem constant byte address 0x4 - core index']
  #allocation1 [shape = 'u32[72,128]{1,0:T(1,128)}', space=vmem, size = 0x9000, scoped, tag = 'internal scratch']
  %s0 = inlined_call_operand.vmem [shape: bf16[512,36], index: 0, kind: input, shape index: {}]
  %s1 = inlined_call_operand.vmem [shape: bf16[36,128], index: 1, kind: input, shape index: {}]
  %s2 = inlined_call_operand.vmem [shape: f32[1,128], index: 2, kind: input, shape index: {}]
  %s3 = inlined_call_operand.hbm [shape: bf16[512,128], index: 3, kind: output, shape index: {}]
  %s4 = sld [smem:[#allocation0]]
  $region45: #{tpu_custom_call.1} parent=0
    _
  %s6 = ssub.s32 1, %s4
  %s7 = scalar_select 0, %s6, %s4
  $region1: #{tpu_custom_call.1} parent=0
    #allocation2 [shape = 'u8[131072]{0}', space=vmem, size = 0x20000, scoped, tag = 'output window, operand 0']
    #allocation3 [shape = 's32[2]{0}', space=sflag, size = 0x8, scoped, tag = 'scoped memory for tpu_custom_call.1']
    %8 = vsyncpa [#allocation3], 0
    %s9 = scalar_lea.sflag [#allocation3], 1
    %10 = vsyncpa %s9, 0
    loop: start=0, step=1, limit=4
    $region2: #{tpu_custom_call.1} parent=1 // loop_pre_header
      _
    $region3: #{tpu_custom_call.1} parent=1 // loop_header
      %s12 = sphi 0, %s16
      %p13 = scmp.ge.s32.totalorder %s12, 4
      %s19 = sphi 0, %s31
      %s20 = sphi 0, %s27
      %s21 = sphi 0, %s19
      %s22 = sphi 0, %s20
      %s23 = sphi 0, %s21
      %s24 = sphi 0, %s22
      %s34 = sphi 0, %s36
      %s37 = sphi 0, %s34
      %s38 = sphi 0, %s37
      %s54 = sphi 0, %s38
      %s60 = sphi 0, %s62
      %s63 = sphi 0, %s60
      %s64 = sphi 0, %s63
      %s80 = sphi 0, %s64
      %s86 = sphi 0, %s88
      %s89 = sphi 0, %s86
      %s90 = sphi 0, %s89
      %s106 = sphi 0, %s90
      %s114 = sphi 0, %s116
      %s117 = sphi 0, %s114
      %s118 = sphi 0, %s117
      %s134 = sphi 0, %s118
    $region4: #{tpu_custom_call.1} parent=1 // loop_header_branch
      %15 = sbr.rel (%p13) target = $region8
    $region5: #{tpu_custom_call.1} parent=1 // loop_body
      %s17 = ssub.s32 %s12, 1
      %s18 = ssub.s32 %s12, 2
      %s25 = sadd.s32 1, %s20
      %p26 = scmp.ge.s32.totalorder %s25, 1
      %s27 = scalar_select %p26, 0, %s25
      %s28 = sadd.s32 1, %s19
      %s29 = scalar_select %p26, %s28, %s19
      %p30 = scmp.ge.s32.totalorder %s29, 2
      %s31 = scalar_select %p30, 0, %s29
      %s32 = ssub.s32 %s19, %s31
      %p33 = scmp.eq.s32.totalorder %s32, 0
      %s35 = sadd.s32 %s34, 1
      %s36 = scalar_select %p33, %s34, %s35
      %p39 = pneg %p33
      %p40 = scmp.eq.s32.totalorder %s12, 1
      %p41 = por %p39, %p40
      %p42 = scmp.ne.s32.totalorder %s34, %s37
      %p43 = scmp.eq.s32.totalorder %s12, 0
      %p44 = por %p42, %p43
      %p45 = scmp.ne.s32.totalorder %s34, %s37
      %p46 = scmp.eq.s32.totalorder %s17, 1
      %p47 = por %p45, %p46
      %p48 = scmp.ne.s32.totalorder %s37, %s38
      %p49 = scmp.eq.s32.totalorder %s17, 0
      %p50 = por %p48, %p49
      %p51 = scmp.ne.s32.totalorder %s37, %s38
      %p52 = scmp.eq.s32.totalorder %s18, 1
      %p53 = por %p51, %p52
      %p55 = scmp.ne.s32.totalorder %s38, %s54
      %p56 = scmp.eq.s32.totalorder %s18, 0
      %p57 = por %p55, %p56
      %s58 = ssub.s32 %s20, %s27
      %p59 = scmp.eq.s32.totalorder %s58, 0
      %s61 = sadd.s32 %s60, 1
      %s62 = scalar_select %p59, %s60, %s61
      %p65 = pneg %p59
      %p66 = scmp.eq.s32.totalorder %s12, 1
      %p67 = por %p65, %p66
      %p68 = scmp.ne.s32.totalorder %s60, %s63
      %p69 = scmp.eq.s32.totalorder %s12, 0
      %p70 = por %p68, %p69
      %p71 = scmp.ne.s32.totalorder %s60, %s63
      %p72 = scmp.eq.s32.totalorder %s17, 1
      %p73 = por %p71, %p72
      %p74 = scmp.ne.s32.totalorder %s63, %s64
      %p75 = scmp.eq.s32.totalorder %s17, 0
      %p76 = por %p74, %p75
      %p77 = scmp.ne.s32.totalorder %s63, %s64
      %p78 = scmp.eq.s32.totalorder %s18, 1
      %p79 = por %p77, %p78
      %p81 = scmp.ne.s32.totalorder %s64, %s80
      %p82 = scmp.eq.s32.totalorder %s18, 0
      %p83 = por %p81, %p82
      %s84 = ssub.s32 %s20, %s27
      %p85 = scmp.eq.s32.totalorder %s84, 0
      %s87 = sadd.s32 %s86, 1
      %s88 = scalar_select %p85, %s86, %s87
      %p91 = pneg %p85
      %p92 = scmp.eq.s32.totalorder %s12, 1
      %p93 = por %p91, %p92
      %p94 = scmp.ne.s32.totalorder %s86, %s89
      %p95 = scmp.eq.s32.totalorder %s12, 0
      %p96 = por %p94, %p95
      %p97 = scmp.ne.s32.totalorder %s86, %s89
      %p98 = scmp.eq.s32.totalorder %s17, 1
      %p99 = por %p97, %p98
      %p100 = scmp.ne.s32.totalorder %s89, %s90
      %p101 = scmp.eq.s32.totalorder %s17, 0
      %p102 = por %p100, %p101
      %p103 = scmp.ne.s32.totalorder %s89, %s90
      %p104 = scmp.eq.s32.totalorder %s18, 1
      %p105 = por %p103, %p104
      %p107 = scmp.ne.s32.totalorder %s90, %s106
      %p108 = scmp.eq.s32.totalorder %s18, 0
      %p109 = por %p107, %p108
      %s110 = ssub.s32 %s19, %s31
      %s111 = ssub.s32 %s20, %s27
      %s112 = sor.u32 %s110, %s111
      %p113 = scmp.eq.s32.totalorder %s112, 0
      %s115 = sadd.s32 %s114, 1
      %s116 = scalar_select %p113, %s114, %s115
      %p119 = pneg %p113
      %p120 = scmp.eq.s32.totalorder %s12, 1
      %p121 = por %p119, %p120
      %p122 = scmp.ne.s32.totalorder %s114, %s117
      %p123 = scmp.eq.s32.totalorder %s12, 0
      %p124 = por %p122, %p123
      %p125 = scmp.ne.s32.totalorder %s114, %s117
      %p126 = scmp.eq.s32.totalorder %s17, 1
      %p127 = por %p125, %p126
      %p128 = scmp.ne.s32.totalorder %s117, %s118
      %p129 = scmp.eq.s32.totalorder %s17, 0
      %p130 = por %p128, %p129
      %p131 = scmp.ne.s32.totalorder %s117, %s118
      %p132 = scmp.eq.s32.totalorder %s18, 1
      %p133 = por %p131, %p132
      %p135 = scmp.ne.s32.totalorder %s118, %s134
      %p136 = scmp.eq.s32.totalorder %s18, 0
      %p137 = por %p135, %p136
      %p138 = scmp.le.s32.totalorder 1, %s12
      %p139 = scmp.lt.s32.totalorder %s12, 3
      %p140 = pnand %p138, %p139
      %p141 = pneg %p140
      // Predicated region
      $region9: #{tpu_custom_call.1} parent=5 // pred_check
        _
      $region10: #{tpu_custom_call.1} parent=5 // pred_check_branch
        %143 = sbr.rel (%p140) target = $region12
      $region11: #{tpu_custom_call.1} parent=5 // pred_region
        %s144 = ssub.s32 %s12, 1
        // Predicated region
        $region13: #{tpu_custom_call.1} parent=11 // pred_check
          %p145 = pneg %p76
        $region14: #{tpu_custom_call.1} parent=11 // pred_check_branch
          %147 = sbr.rel (%p145) target = $region16
        $region15: #{tpu_custom_call.1} parent=11 // pred_region
          %p148 = scmp.lt.s32.totalorder %s22, 0
          %s149 = scalar_select %p148, %s22, 0
          %s150 = smul.addr %s149, 4
          %s151 = scalar_lea.vmem %s1, %s150
        $region16: #{tpu_custom_call.1} parent=11 // pred_fallthru
          _
        // Predicated region
        $region17: #{tpu_custom_call.1} parent=11 // pred_check
          %p152 = pneg %p102
        $region18: #{tpu_custom_call.1} parent=11 // pred_check_branch
          %154 = sbr.rel (%p152) target = $region20
        $region19: #{tpu_custom_call.1} parent=11 // pred_region
          %p155 = scmp.lt.s32.totalorder %s22, 0
          %s156 = scalar_select %p155, %s22, 0
          %s157 = scalar_lea.vmem %s2, %s156
        $region20: #{tpu_custom_call.1} parent=11 // pred_fallthru
          _
      $region12: #{tpu_custom_call.1} parent=5 // pred_fallthru
        _
      %p158 = scmp.lt.s32.totalorder %s12, 2
      // Predicated region
      $region21: #{tpu_custom_call.1} parent=5 // pred_check
        %p159 = pneg %p158
      $region22: #{tpu_custom_call.1} parent=5 // pred_check_branch
        %161 = sbr.rel (%p159) target = $region24
      $region23: #{tpu_custom_call.1} parent=5 // pred_region
        // Predicated region
        $region25: #{tpu_custom_call.1} parent=23 // pred_check
          %p162 = pneg %p44
        $region26: #{tpu_custom_call.1} parent=23 // pred_check_branch
          %164 = sbr.rel (%p162) target = $region28
        $region27: #{tpu_custom_call.1} parent=23 // pred_region
          %s165 = smul.u32 32, %s19
          %p166 = scmp.lt.s32.totalorder %s165, 63
          %s167 = scalar_select %p166, %s165, 63
          %s168 = smul.addr %s167, 4
          %s169 = scalar_lea.vmem %s0, %s168
          %s170 = smul.u32 32, %s19
        $region28: #{tpu_custom_call.1} parent=23 // pred_fallthru
          _
      $region24: #{tpu_custom_call.1} parent=5 // pred_fallthru
        _
      %p171 = scmp.le.s32.totalorder 1, %s12
      %p172 = scmp.lt.s32.totalorder %s12, 3
      %p173 = pnand %p171, %p172
      %p174 = pneg %p173
      // Predicated region
      $region29: #{tpu_custom_call.1} parent=5 // pred_check
        _
      $region30: #{tpu_custom_call.1} parent=5 // pred_check_branch
        %176 = sbr.rel (%p173) target = $region32
      $region31: #{tpu_custom_call.1} parent=5 // pred_region
        %s177 = ssub.s32 %s12, 1
        %s178 = smul.u32 32, %s21
        %p179 = scmp.lt.s32.totalorder %s178, 63
        %s180 = scalar_select %p179, %s178, 63
        %s181 = smul.addr %s180, 4
        %s182 = scalar_lea.vmem %s0, %s181
        %p183 = pneg %p50
        %p184 = pneg %p47
        %p185 = scmp.lt.s32.totalorder %s22, 0
        %s186 = scalar_select %p185, %s22, 0
        %s187 = smul.addr %s186, 4
        %s188 = scalar_lea.vmem %s1, %s187
        %p189 = pneg %p76
        %p190 = pneg %p73
        %p191 = scmp.lt.s32.totalorder %s22, 0
        %s192 = scalar_select %p191, %s22, 0
        %s193 = scalar_lea.vmem %s2, %s192
        %p194 = pneg %p102
        %p195 = pneg %p99
        %p196 = pneg %p130
        %p197 = pneg %p127
        %s198 = sand.u32 %s117, 1
        %s199 = scalar_lea.sflag [#allocation3], %s198
        %s200 = sand.u32 %s117, 1
        %s201 = smul.addr %s200, 128
        %s202 = scalar_lea.vmem [#allocation2], %s201
        %s203 = smul.u32 32, %s21
        %p204 = scmp.lt.s32.totalorder %s203, 63
        %s205 = scalar_select %p204, %s203, 63
        %s206 = smul.addr %s205, 4
        %s207 = scalar_lea.vmem %s0, %s206
        %s208 = smul.u32 32, %s21
        %p209 = scmp.lt.s32.totalorder %s22, 0
        %s210 = scalar_select %p209, %s22, 0
        %s211 = smul.addr %s210, 4
        %s212 = scalar_lea.vmem %s1, %s211
        %p213 = scmp.lt.s32.totalorder %s22, 0
        %s214 = scalar_select %p213, %s22, 0
        %s215 = scalar_lea.vmem %s2, %s214
        %s216 = smul.u32 32, %s21
        %v218 = vld [vmem:[%s207] sm:$0xf]
        %v219 = vld [vmem:[%s207 + $0x4] sm:$0xf]
        %v220 = vld [vmem:[%s207 + $0x8] sm:$0xf]
        %v221 = vld [vmem:[%s207 + $0xc] sm:$0xf]
        %v222 = vld [vmem:[%s207 + $0x10] sm:$0xf]
        %v223 = vld [vmem:[%s207 + $0x14] sm:$0xf]
        %v224 = vld [vmem:[%s207 + $0x18] sm:$0xf]
        %v225 = vld [vmem:[%s207 + $0x1c] sm:$0xf]
        %v226 = vld [vmem:[%s207 + $0x20] sm:$0xf]
        %v227 = vld [vmem:[%s207 + $0x24] sm:$0xf]
        %v228 = vld [vmem:[%s207 + $0x28] sm:$0xf]
        %v229 = vld [vmem:[%s207 + $0x2c] sm:$0xf]
        %v230 = vld [vmem:[%s207 + $0x30] sm:$0xf]
        %v231 = vld [vmem:[%s207 + $0x34] sm:$0xf]
        %v232 = vld [vmem:[%s207 + $0x38] sm:$0xf]
        %v233 = vld [vmem:[%s207 + $0x3c] sm:$0xf]
        %v234 = vld [vmem:[%s207 + $0x40] sm:$0xf]
        %v235 = vld [vmem:[%s207 + $0x44] sm:$0xf]
        %v236 = vld [vmem:[%s207 + $0x48] sm:$0xf]
        %v237 = vld [vmem:[%s207 + $0x4c] sm:$0xf]
        %v238 = vld [vmem:[%s207 + $0x50] sm:$0xf]
        %v239 = vld [vmem:[%s207 + $0x54] sm:$0xf]
        %v240 = vld [vmem:[%s207 + $0x58] sm:$0xf]
        %v241 = vld [vmem:[%s207 + $0x5c] sm:$0xf]
        %v242 = vld [vmem:[%s207 + $0x60] sm:$0xf]
        %v243 = vld [vmem:[%s207 + $0x64] sm:$0xf]
        %v244 = vld [vmem:[%s207 + $0x68] sm:$0xf]
        %v245 = vld [vmem:[%s207 + $0x6c] sm:$0xf]
        %v246 = vld [vmem:[%s207 + $0x70] sm:$0xf]
        %v247 = vld [vmem:[%s207 + $0x74] sm:$0xf]
        %v248 = vld [vmem:[%s207 + $0x78] sm:$0xf]
        %v249 = vld [vmem:[%s207 + $0x7c] sm:$0xf]
        %v250 = vld [vmem:[%s212] sm:$0xf]
        %v251 = vld [vmem:[%s212 + $0x4] sm:$0xf]
        %v252 = vld [vmem:[%s212 + $0x8] sm:$0xf]
        %v253 = vld [vmem:[%s212 + $0xc] sm:$0xf]
        %v254 = vld [vmem:[%s212 + $0x10] sm:$0x3]
        %v255 = vld [vmem:[%s215] sm:$0x1]
        %v257 = vperm.slane %v255, 0
        %v291 = vunpack.c.l.b16 %v218
        %v292 = vunpack.c.l.b16 %v219
        %v293 = vunpack.c.l.b16 %v220
        %v294 = vunpack.c.l.b16 %v221
        %v295 = vunpack.c.l.b16 %v222
        %v296 = vunpack.c.l.b16 %v223
        %v297 = vunpack.c.l.b16 %v224
        %v298 = vunpack.c.l.b16 %v225
        %v299 = vunpack.c.l.b16 %v226
        %v300 = vunpack.c.l.b16 %v227
        %v301 = vunpack.c.l.b16 %v228
        %v302 = vunpack.c.l.b16 %v229
        %v303 = vunpack.c.l.b16 %v230
        %v304 = vunpack.c.l.b16 %v231
        %v305 = vunpack.c.l.b16 %v232
        %v306 = vunpack.c.l.b16 %v233
        %v307 = vunpack.c.l.b16 %v234
        %v308 = vunpack.c.l.b16 %v235
        %v309 = vunpack.c.l.b16 %v236
        %v310 = vunpack.c.l.b16 %v237
        %v311 = vunpack.c.l.b16 %v238
        %v312 = vunpack.c.l.b16 %v239
        %v313 = vunpack.c.l.b16 %v240
        %v314 = vunpack.c.l.b16 %v241
        %v315 = vunpack.c.l.b16 %v242
        %v316 = vunpack.c.l.b16 %v243
        %v317 = vunpack.c.l.b16 %v244
        %v318 = vunpack.c.l.b16 %v245
        %v319 = vunpack.c.l.b16 %v246
        %v320 = vunpack.c.l.b16 %v247
        %v321 = vunpack.c.l.b16 %v248
        %v322 = vunpack.c.l.b16 %v249
        %v323 = vpack.c.b16 %v292, %v291
        %v324 = vpack.c.b16 %v294, %v293
        %v325 = vpack.c.b16 %v296, %v295
        %v326 = vpack.c.b16 %v298, %v297
        %v327 = vpack.c.b16 %v300, %v299
        %v328 = vpack.c.b16 %v302, %v301
        %v329 = vpack.c.b16 %v304, %v303
        %v330 = vpack.c.b16 %v306, %v305
        %v331 = vpack.c.b16 %v308, %v307
        %v332 = vpack.c.b16 %v310, %v309
        %v333 = vpack.c.b16 %v312, %v311
        %v334 = vpack.c.b16 %v314, %v313
        %v335 = vpack.c.b16 %v316, %v315
        %v336 = vpack.c.b16 %v318, %v317
        %v337 = vpack.c.b16 %v320, %v319
        %v338 = vpack.c.b16 %v322, %v321
        %v344 = vunpack.c.l.b16 %v250
        %v345 = vunpack.c.l.b16 %v251
        %v346 = vunpack.c.l.b16 %v252
        %v347 = vunpack.c.l.b16 %v253
        %v348 = vunpack.c.l.b16 %v254
        %v349 = vpack.c.b16 %v345, %v344
        %v350 = vpack.c.b16 %v347, %v346
        %v351 = vpack.c.b16 %v348, %v348
        %vm354 = vcmask 293888
        %v356 = vsel %vm354, %v323, 0
        %v359 = vsel %vm354, %v324, 0
        %v362 = vsel %vm354, %v325, 0
        %v365 = vsel %vm354, %v326, 0
        %v368 = vsel %vm354, %v327, 0
        %v371 = vsel %vm354, %v328, 0
        %v374 = vsel %vm354, %v329, 0
        %v377 = vsel %vm354, %v330, 0
        %v380 = vsel %vm354, %v331, 0
        %v383 = vsel %vm354, %v332, 0
        %v386 = vsel %vm354, %v333, 0
        %v389 = vsel %vm354, %v334, 0
        %v392 = vsel %vm354, %v335, 0
        %v395 = vsel %vm354, %v336, 0
        %v398 = vsel %vm354, %v337, 0
        %v401 = vsel %vm354, %v338, 0
        %vm403 = vcmask 1041408
        %v405 = vsel %vm403, %v351, 0
        %407 = vmatpush.bf16.msra.mxu0 0
        %408 = vmatpush.bf16.msra.mxu0 0
        %409 = vmatpush.bf16.msra.mxu0 0
        %410 = vmatpush.bf16.msra.mxu0 0
        %411 = vmatpush.bf16.msra.mxu0 0
        %412 = vmatpush.bf16.msra.mxu0 %v405
        %413 = vmatpush.bf16.msra.mxu0 %v350
        %414 = vmatpush.bf16.msra.mxu0 %v349
        %415 = vmatmul.bf16.gmra.mxu0 %v356
        %v416 = vpop.f32.mrf.mxu0
        %v417 = vadd.f32 %v257, %v416
        %v418 = vpop.f32.mrf.mxu0
        %v419 = vadd.f32 %v257, %v418
        %420 = vmatmul.bf16.gmra.mxu0 %v359
        %v421 = vpop.f32.mrf.mxu0
        %v422 = vadd.f32 %v257, %v421
        %v423 = vpop.f32.mrf.mxu0
        %v424 = vadd.f32 %v257, %v423
        %425 = vmatmul.bf16.gmra.mxu0 %v362
        %v426 = vpop.f32.mrf.mxu0
        %v427 = vadd.f32 %v257, %v426
        %v428 = vpop.f32.mrf.mxu0
        %v429 = vadd.f32 %v257, %v428
        %430 = vmatmul.bf16.gmra.mxu0 %v365
        %v431 = vpop.f32.mrf.mxu0
        %v432 = vadd.f32 %v257, %v431
        %v433 = vpop.f32.mrf.mxu0
        %v434 = vadd.f32 %v257, %v433
        %435 = vmatmul.bf16.gmra.mxu0 %v368
        %v436 = vpop.f32.mrf.mxu0
        %v437 = vadd.f32 %v257, %v436
        %v438 = vpop.f32.mrf.mxu0
        %v439 = vadd.f32 %v257, %v438
        %440 = vmatmul.bf16.gmra.mxu0 %v371
        %v441 = vpop.f32.mrf.mxu0
        %v442 = vadd.f32 %v257, %v441
        %v443 = vpop.f32.mrf.mxu0
        %v444 = vadd.f32 %v257, %v443
        %445 = vmatmul.bf16.gmra.mxu0 %v374
        %v446 = vpop.f32.mrf.mxu0
        %v447 = vadd.f32 %v257, %v446
        %v448 = vpop.f32.mrf.mxu0
        %v449 = vadd.f32 %v257, %v448
        %450 = vmatmul.bf16.gmra.mxu0 %v377
        %v451 = vpop.f32.mrf.mxu0
        %v452 = vadd.f32 %v257, %v451
        %v453 = vpop.f32.mrf.mxu0
        %v454 = vadd.f32 %v257, %v453
        %455 = vmatmul.bf16.gmra.mxu0 %v380
        %v456 = vpop.f32.mrf.mxu0
        %v457 = vadd.f32 %v257, %v456
        %v458 = vpop.f32.mrf.mxu0
        %v459 = vadd.f32 %v257, %v458
        %460 = vmatmul.bf16.gmra.mxu0 %v383
        %v461 = vpop.f32.mrf.mxu0
        %v462 = vadd.f32 %v257, %v461
        %v463 = vpop.f32.mrf.mxu0
        %v464 = vadd.f32 %v257, %v463
        %465 = vmatmul.bf16.gmra.mxu0 %v386
        %v466 = vpop.f32.mrf.mxu0
        %v467 = vadd.f32 %v257, %v466
        %v468 = vpop.f32.mrf.mxu0
        %v469 = vadd.f32 %v257, %v468
        %470 = vmatmul.bf16.gmra.mxu0 %v389
        %v471 = vpop.f32.mrf.mxu0
        %v472 = vadd.f32 %v257, %v471
        %v473 = vpop.f32.mrf.mxu0
        %v474 = vadd.f32 %v257, %v473
        %475 = vmatmul.bf16.gmra.mxu0 %v392
        %v476 = vpop.f32.mrf.mxu0
        %v477 = vadd.f32 %v257, %v476
        %v478 = vpop.f32.mrf.mxu0
        %v479 = vadd.f32 %v257, %v478
        %480 = vmatmul.bf16.gmra.mxu0 %v395
        %v481 = vpop.f32.mrf.mxu0
        %v482 = vadd.f32 %v257, %v481
        %v483 = vpop.f32.mrf.mxu0
        %v484 = vadd.f32 %v257, %v483
        %485 = vmatmul.bf16.gmra.mxu0 %v398
        %v486 = vpop.f32.mrf.mxu0
        %v487 = vadd.f32 %v257, %v486
        %v488 = vpop.f32.mrf.mxu0
        %v489 = vadd.f32 %v257, %v488
        %490 = vmatmul.bf16.gmra.mxu0 %v401
        %v491 = vpop.f32.mrf.mxu0
        %v492 = vadd.f32 %v257, %v491
        %v493 = vpop.f32.mrf.mxu0
        %v494 = vadd.f32 %v257, %v493
        %495 = vdwg.mxu0
        %v496 = vpack.c.bf16 %v417, %v417
        %v497 = vpack.c.bf16 %v419, %v419
        %v498 = vpack.c.bf16 %v422, %v422
        %v499 = vpack.c.bf16 %v424, %v424
        %v500 = vpack.c.bf16 %v427, %v427
        %v501 = vpack.c.bf16 %v429, %v429
        %v502 = vpack.c.bf16 %v432, %v432
        %v503 = vpack.c.bf16 %v434, %v434
        %v504 = vpack.c.bf16 %v437, %v437
        %v505 = vpack.c.bf16 %v439, %v439
        %v506 = vpack.c.bf16 %v442, %v442
        %v507 = vpack.c.bf16 %v444, %v444
        %v508 = vpack.c.bf16 %v447, %v447
        %v509 = vpack.c.bf16 %v449, %v449
        %v510 = vpack.c.bf16 %v452, %v452
        %v511 = vpack.c.bf16 %v454, %v454
        %v512 = vpack.c.bf16 %v457, %v457
        %v513 = vpack.c.bf16 %v459, %v459
        %v514 = vpack.c.bf16 %v462, %v462
        %v515 = vpack.c.bf16 %v464, %v464
        %v516 = vpack.c.bf16 %v467, %v467
        %v517 = vpack.c.bf16 %v469, %v469
        %v518 = vpack.c.bf16 %v472, %v472
        %v519 = vpack.c.bf16 %v474, %v474
        %v520 = vpack.c.bf16 %v477, %v477
        %v521 = vpack.c.bf16 %v479, %v479
        %v522 = vpack.c.bf16 %v482, %v482
        %v523 = vpack.c.bf16 %v484, %v484
        %v524 = vpack.c.bf16 %v487, %v487
        %v525 = vpack.c.bf16 %v489, %v489
        %v526 = vpack.c.bf16 %v492, %v492
        %v527 = vpack.c.bf16 %v494, %v494
        %528 = vst [vmem:[%s202] sm:$0xf] %v496
        %529 = vst [vmem:[%s202 + $0x4] sm:$0xf] %v497
        %530 = vst [vmem:[%s202 + $0x8] sm:$0xf] %v498
        %531 = vst [vmem:[%s202 + $0xc] sm:$0xf] %v499
        %532 = vst [vmem:[%s202 + $0x10] sm:$0xf] %v500
        %533 = vst [vmem:[%s202 + $0x14] sm:$0xf] %v501
        %534 = vst [vmem:[%s202 + $0x18] sm:$0xf] %v502
        %535 = vst [vmem:[%s202 + $0x1c] sm:$0xf] %v503
        %536 = vst [vmem:[%s202 + $0x20] sm:$0xf] %v504
        %537 = vst [vmem:[%s202 + $0x24] sm:$0xf] %v505
        %538 = vst [vmem:[%s202 + $0x28] sm:$0xf] %v506
        %539 = vst [vmem:[%s202 + $0x2c] sm:$0xf] %v507
        %540 = vst [vmem:[%s202 + $0x30] sm:$0xf] %v508
        %541 = vst [vmem:[%s202 + $0x34] sm:$0xf] %v509
        %542 = vst [vmem:[%s202 + $0x38] sm:$0xf] %v510
        %543 = vst [vmem:[%s202 + $0x3c] sm:$0xf] %v511
        %544 = vst [vmem:[%s202 + $0x40] sm:$0xf] %v512
        %545 = vst [vmem:[%s202 + $0x44] sm:$0xf] %v513
        %546 = vst [vmem:[%s202 + $0x48] sm:$0xf] %v514
        %547 = vst [vmem:[%s202 + $0x4c] sm:$0xf] %v515
        %548 = vst [vmem:[%s202 + $0x50] sm:$0xf] %v516
        %549 = vst [vmem:[%s202 + $0x54] sm:$0xf] %v517
        %550 = vst [vmem:[%s202 + $0x58] sm:$0xf] %v518
        %551 = vst [vmem:[%s202 + $0x5c] sm:$0xf] %v519
        %552 = vst [vmem:[%s202 + $0x60] sm:$0xf] %v520
        %553 = vst [vmem:[%s202 + $0x64] sm:$0xf] %v521
        %554 = vst [vmem:[%s202 + $0x68] sm:$0xf] %v522
        %555 = vst [vmem:[%s202 + $0x6c] sm:$0xf] %v523
        %556 = vst [vmem:[%s202 + $0x70] sm:$0xf] %v524
        %557 = vst [vmem:[%s202 + $0x74] sm:$0xf] %v525
        %558 = vst [vmem:[%s202 + $0x78] sm:$0xf] %v526
        %559 = vst [vmem:[%s202 + $0x7c] sm:$0xf] %v527
        %s560 = sand.u32 %s117, 1
        %s561 = scalar_lea.sflag [#allocation3], %s560
        %s562 = sand.u32 %s117, 1
        %s563 = smul.addr %s562, 128
        %s564 = scalar_lea.vmem [#allocation2], %s563
        // Predicated region
        $region33: #{tpu_custom_call.1} parent=31 // pred_check
          %p565 = pneg %p127
        $region34: #{tpu_custom_call.1} parent=31 // pred_check_branch
          %567 = sbr.rel (%p565) target = $region36
        $region35: #{tpu_custom_call.1} parent=31 // pred_region
          %s568 = smul.u32 32, %s21
          %570 = vsyncadd %s561, 0
          %s571 = sadd.s32 %s22, %s568
          %s572 = smul.addr %s571, 4
          %s573 = scalar_lea.hbm %s3, %s572
          %s574 = sshll.u32 %s564, 4
          %s575 = int_to_ptr.vmem [resolvable:$true] %s574
          %s576 = sshll.u32 %s573, 4
          %s577 = int_to_ptr.hbm [resolvable:$true] %s576
          %582 = dma.vmem_to_hbm [thread:$0]  %s575, 2048, %s577, %s561, 64, 64, 4
        $region36: #{tpu_custom_call.1} parent=31 // pred_fallthru
          _
      $region32: #{tpu_custom_call.1} parent=5 // pred_fallthru
        _
      %p583 = scmp.le.s32.totalorder 2, %s12
      // Predicated region
      $region37: #{tpu_custom_call.1} parent=5 // pred_check
        %p584 = pneg %p583
      $region38: #{tpu_custom_call.1} parent=5 // pred_check_branch
        %586 = sbr.rel (%p584) target = $region40
      $region39: #{tpu_custom_call.1} parent=5 // pred_region
        %s587 = ssub.s32 %s12, 2
        // Predicated region
        $region41: #{tpu_custom_call.1} parent=39 // pred_check
          %p588 = pneg %p133
        $region42: #{tpu_custom_call.1} parent=39 // pred_check_branch
          %590 = sbr.rel (%p588) target = $region44
        $region43: #{tpu_custom_call.1} parent=39 // pred_region
          %s591 = sand.u32 %s118, 1
          %s592 = scalar_lea.sflag [#allocation3], %s591
          %s593 = sand.u32 %s118, 1
          %s594 = smul.addr %s593, 128
          %s595 = scalar_lea.vmem [#allocation2], %s594
          %597 = dma.done %s592, 2048
        $region44: #{tpu_custom_call.1} parent=39 // pred_fallthru
          _
      $region40: #{tpu_custom_call.1} parent=5 // pred_fallthru
        _
    $region6: #{tpu_custom_call.1} parent=1 // loop_footer
      %s16 = sadd.s32 1, %s12
    $region7: #{tpu_custom_call.1} parent=1 // loop_footer_branch
      %11 = sbr.rel target = $region3
    $region8: #{tpu_custom_call.1} parent=1 // loop_exit
      _
    %598 = vsyncpa [#allocation3], 1
    %s599 = scalar_lea.sflag [#allocation3], 1
    %600 = vsyncpa %s599, 1

</llo_original>
